<compile_context>
chip_gen: v7x
topology: tpu7x:2x2x1
jax: 0.10.0
libtpu: 0.0.40
codegen_flags: <defaults>
</compile_context>

<pallas_src>
import functools
import math

import numpy as np
import jax
import jax.numpy as jnp
from jax import lax
from jax.experimental import pallas as pl
from jax.experimental.pallas import tpu as pltpu

_VMEM_LIMIT_BYTES = 48 * 1024 * 1024   # headroom below v7x's 64 MiB physical VMEM


def _prelu(y, alpha):
    return jnp.where(y >= 0.0, y, y * alpha)


# ---------------------------------------------------------------------------
# In-kernel 3x3 / pad-1 / stride-1 conv over a column-wrapped flat padded
# scratch ((H+2)*W + 2, Cin): per-tap accumulation, boundary taps masked.
# ---------------------------------------------------------------------------
def _conv3x3_flat(xs_ref, w, b, alpha, H, W):
    Cout = w.shape[-1]
    HW = H * W
    col = lax.broadcasted_iota(jnp.int32, (HW, 1), 0) % W
    acc = jnp.zeros((HW, Cout), jnp.float32)
    for kh in range(3):
        for kw in range(3):
            start = kh * W + kw
            tap = xs_ref[pl.ds(start, HW), :]
            if kw != 1:                          # mask the wrapped left/right columns
                c = col + (kw - 1)
                valid = jnp.logical_and(c >= 0, c <= W - 1)
                tap = jnp.where(valid, tap, jnp.zeros_like(tap))
            acc = acc + jnp.dot(tap, w[kh * 3 + kw],
                                preferred_element_type=jnp.float32)
    return _prelu(acc + b, alpha)


def _store_flat_padded(s_ref, x_flat, H, W):
    """Write an (H*W, C) image into the flat padded layout ((H+2)*W + 2, C):
    [1 zero slot | zero pad row | H image rows | zero pad row | 1 zero slot]."""
    C = s_ref.shape[-1]
    zb = jnp.zeros((W + 1, C), s_ref.dtype)
    s_ref[pl.ds(0, W + 1), :] = zb
    s_ref[pl.ds((H + 1) * W + 1, W + 1), :] = zb
    s_ref[pl.ds(W + 1, H * W), :] = x_flat.astype(s_ref.dtype)


# ---------------------------------------------------------------------------
# Kernel 1: fused  conv3x3+PReLU -> conv3x3+PReLU (+ optional residual add).
# Used for the four residual blocks and (with the re-packed ConvTranspose
# weights) for the whole two-branch head.  Padding is done in-kernel; the
# intermediate activation lives only in a VMEM scratch.
# ---------------------------------------------------------------------------
def _double_conv_kernel(x_ref, w0_ref, b0_ref, a0_ref, w1_ref, b1_ref, a1_ref,
                        o_ref, s0_ref, s1_ref, *, add_residual):
    _, H, W, Cin = x_ref.shape
    x_flat = x_ref[0].reshape(H * W, Cin)
    _store_flat_padded(s0_ref, x_flat, H, W)
    t = _conv3x3_flat(s0_ref, w0_ref[...], b0_ref[...], a0_ref[...], H, W)
    _store_flat_padded(s1_ref, t, H, W)
    y = _conv3x3_flat(s1_ref, w1_ref[...], b1_ref[...], a1_ref[...], H, W)
    if add_residual:
        y = y + x_flat.astype(jnp.float32)
    o_ref[0] = y.astype(o_ref.dtype)


# ---------------------------------------------------------------------------
# Kernel 2: Conv2d(3, stride=2, pad=1) + PReLU computed directly.
# The wrapper folds column pairs into the lane dim (free reshape); the kernel
# pads in VMEM and handles the row phases with a leading-dim parity reshape,
# so only 6 taps (contraction 2*Cin) are needed and nothing extra hits HBM.
# ---------------------------------------------------------------------------
def _stride2_conv_kernel(x_ref, w_ref, b_ref, a_ref, o_ref, xpad_ref):
    _, H, Wq, C2 = x_ref.shape
    Ho, Wo = H // 2, Wq
    xpad_ref[...] = jnp.zeros(xpad_ref.shape, xpad_ref.dtype)
    xpad_ref[pl.ds(1, H), pl.ds(1, Wq), :] = x_ref[0]
    xv = xpad_ref[...].reshape((H + 2) // 2, 2, Wq + 1, C2)   # leading-dim split (free)
    wv = w_ref[...]
    acc = jnp.zeros((Ho * Wo, wv.shape[-1]), jnp.float32)
    for kh in range(3):
        slab = xv[kh // 2:kh // 2 + Ho, kh % 2]               # padded rows 2*i + kh
        for kwp in range(2):
            tap = slab[:, kwp:kwp + Wo, :].reshape(Ho * Wo, C2)
            acc = acc + jnp.dot(tap, wv[kh * 2 + kwp],
                                preferred_element_type=jnp.float32)
    o_ref[0] = _prelu(acc + b_ref[...], a_ref[...]).astype(o_ref.dtype)


# ---------------------------------------------------------------------------
# Wrappers
# ---------------------------------------------------------------------------
def stride2_conv(x, layer):
    N, H, W, Cin = x.shape
    assert H % 2 == 0 and W % 2 == 0
    Wq, C2 = W // 2, 2 * Cin
    Cout = layer["w"].shape[-1]
    Ho, Wo = H // 2, W // 2
    xm = x.reshape(N, H, Wq, C2)                              # free row-major reshape
    flops = 2 * N * Ho * Wo * 6 * C2 * Cout
    bytes_accessed = int(xm.size * 2 + layer["w"].size * 2 + Cout * 8
                         + N * Ho * Wo * Cout * 2)
    out = pl.pallas_call(
        _stride2_conv_kernel,
        out_shape=jax.ShapeDtypeStruct((N, Ho * Wo, Cout), jnp.bfloat16),
        grid=(N,),
        in_specs=[
            pl.BlockSpec((1, H, Wq, C2), lambda n: (n, 0, 0, 0)),
            pl.BlockSpec((6, C2, Cout), lambda n: (0, 0, 0)),
            pl.BlockSpec((1, Cout), lambda n: (0, 0)),
            pl.BlockSpec((1, Cout), lambda n: (0, 0)),
        ],
        out_specs=pl.BlockSpec((1, Ho * Wo, Cout), lambda n: (n, 0, 0)),
        scratch_shapes=[pltpu.VMEM((H + 2, Wq + 1, C2), jnp.bfloat16)],
        compiler_params=pltpu.CompilerParams(
            dimension_semantics=("parallel",),
            vmem_limit_bytes=_VMEM_LIMIT_BYTES),
        cost_estimate=pl.CostEstimate(flops=flops, transcendentals=0,
                                      bytes_accessed=bytes_accessed),
    )(xm, layer["w"], layer["b"], layer["a"])
    return out.reshape(N, Ho, Wo, Cout)


def double_conv(x, blk, *, residual, out_dtype=jnp.bfloat16):
    N, H, W, Cin = x.shape
    Cmid = blk["w0"].shape[-1]
    Cout = blk["w1"].shape[-1]
    if residual:
        assert Cout == Cin
    kern = functools.partial(_double_conv_kernel, add_residual=residual)
    flops = 2 * N * H * W * 9 * (Cin * Cmid + Cmid * Cout)
    out_bytes = N * H * W * Cout * np.dtype(out_dtype).itemsize
    bytes_accessed = int(x.size * 2 + (blk["w0"].size + blk["w1"].size) * 2
                         + (Cmid + Cout) * 8 + out_bytes)
    out = pl.pallas_call(
        kern,
        out_shape=jax.ShapeDtypeStruct((N, H * W, Cout), out_dtype),
        grid=(N,),
        in_specs=[
            pl.BlockSpec((1, H, W, Cin), lambda n: (n, 0, 0, 0)),
            pl.BlockSpec((9, Cin, Cmid), lambda n: (0, 0, 0)),
            pl.BlockSpec((1, Cmid), lambda n: (0, 0)),
            pl.BlockSpec((1, Cmid), lambda n: (0, 0)),
            pl.BlockSpec((9, Cmid, Cout), lambda n: (0, 0, 0)),
            pl.BlockSpec((1, Cout), lambda n: (0, 0)),
            pl.BlockSpec((1, Cout), lambda n: (0, 0)),
        ],
        out_specs=pl.BlockSpec((1, H * W, Cout), lambda n: (n, 0, 0)),
        scratch_shapes=[pltpu.VMEM(((H + 2) * W + 2, Cin), jnp.bfloat16),
                        pltpu.VMEM(((H + 2) * W + 2, Cmid), jnp.bfloat16)],
        compiler_params=pltpu.CompilerParams(
            dimension_semantics=("parallel",),
            vmem_limit_bytes=_VMEM_LIMIT_BYTES),
        cost_estimate=pl.CostEstimate(flops=flops, transcendentals=0,
                                      bytes_accessed=bytes_accessed),
    )(x, blk["w0"], blk["b0"], blk["a0"], blk["w1"], blk["b1"], blk["a1"])
    return out.reshape(N, H, W, Cout)


# ---------------------------------------------------------------------------
# Weight preparation (once, at init): per-tap layouts, stride-2 pair packing,
# sub-pixel ConvTranspose packing and its composition with the second layer.
# ---------------------------------------------------------------------------
def _prep_conv3x3(w_hwio, b, alpha):
    w = np.asarray(w_hwio, np.float32)
    Cin, Cout = w.shape[2], w.shape[3]
    return (jnp.asarray(w.reshape(9, Cin, Cout)).astype(jnp.bfloat16),
            jnp.asarray(np.asarray(b, np.float32).reshape(1, Cout)),
            jnp.asarray(np.asarray(alpha, np.float32).reshape(1, Cout)))


def _prep_double(l0, l1):
    w0, b0, a0 = _prep_conv3x3(*l0)
    w1, b1, a1 = _prep_conv3x3(*l1)
    return {"w0": w0, "b0": b0, "a0": a0, "w1": w1, "b1": b1, "a1": a1}


def _prep_stride2(w_hwio, b, alpha):
    """Conv2d(3, stride=2, pad=1) -> 6 taps of contraction 2*Cin over the
    column-pair-merged input (exact; the unused half of the left tap is zero)."""
    w = np.asarray(w_hwio, np.float32)
    Cin, Cout = w.shape[2], w.shape[3]
    w6 = np.zeros((3, 2, 2 * Cin, Cout), np.float32)
    for kh in range(3):
        w6[kh, 0, Cin:, :] = w[kh, 0]      # original column 2j-1 (odd half of pair j)
        w6[kh, 1, :Cin, :] = w[kh, 1]      # original column 2j   (even half of pair j+1)
        w6[kh, 1, Cin:, :] = w[kh, 2]      # original column 2j+1 (odd half of pair j+1)
    return {"w": jnp.asarray(w6.reshape(6, 2 * Cin, Cout)).astype(jnp.bfloat16),
            "b": jnp.asarray(np.asarray(b, np.float32).reshape(1, Cout)),
            "a": jnp.asarray(np.asarray(alpha, np.float32).reshape(1, Cout))}


def _convT_subpixel_w3(wt):
    """ConvTranspose2d(Cin, Cout, 4, stride=2, pad=1) == one 3x3/pad-1 conv on the
    input grid emitting the 4 sub-pixel phases.  Returns w3[kh,kw,ci,pa,pb,co]."""
    wt = np.asarray(wt, np.float32)
    Cin, Cout = wt.shape[0], wt.shape[1]
    wf = np.transpose(wt[:, :, ::-1, ::-1], (2, 3, 0, 1))       # flipped (4,4,Cin,Cout)
    w3 = np.zeros((3, 3, Cin, 2, 2, Cout), np.float32)
    for kh in range(3):
        for kw in range(3):
            for pa in range(2):
                for pb in range(2):
                    if 0 <= kh - pa <= 1 and 0 <= kw - pb <= 1:
                        w3[kh, kw, :, pa, pb, :] = wf[2 * kh - pa, 2 * kw - pb]
    return w3


def _prep_head_up(heads):
    """First ConvTranspose(+PReLU) of each head, phase-stacked, fused along Cout."""
    w_parts, b_parts, a_parts = [], [], []
    for wt, b, alpha in heads:
        w3 = _convT_subpixel_w3(wt)
        Cin, Cout = w3.shape[2], w3.shape[5]
        w_parts.append(w3.reshape(3, 3, Cin, 4 * Cout))
        b_parts.append(np.tile(np.asarray(b, np.float32), 4))
        a_parts.append(np.tile(np.asarray(alpha, np.float32), 4))
    W = np.concatenate(w_parts, axis=-1)
    Cin, Ct = W.shape[2], W.shape[3]
    return (jnp.asarray(W.reshape(9, Cin, Ct)).astype(jnp.bfloat16),
            jnp.asarray(np.concatenate(b_parts).reshape(1, Ct), jnp.float32),
            jnp.asarray(np.concatenate(a_parts).reshape(1, Ct), jnp.float32))


def _prep_head_out(heads):
    """Second ConvTranspose of each head, re-packed to consume the PHASE-STACKED
    first-ConvTranspose output directly (absorbs the intermediate depth-to-space):
    a 3x3/pad-1 conv from 4*Cin phase channels to 16*Cout channels ordered
    [a][b][e][f][co]; heads fused block-diagonally."""
    heads = [(np.asarray(wt, np.float32), np.asarray(b, np.float32)) for wt, b in heads]
    cin_tot = sum(4 * wt.shape[0] for wt, _ in heads)
    cout_tot = sum(16 * wt.shape[1] for wt, _ in heads)
    Wc = np.zeros((3, 3, cin_tot, cout_tot), np.float32)
    bias = np.zeros((cout_tot,), np.float32)
    out_couts = []
    io = oo = 0
    for wt, b in heads:
        Cin2, Cout = wt.shape[0], wt.shape[1]
        w2 = _convT_subpixel_w3(wt)                             # [dh, dw, ci, e, f, co]
        wcb = np.zeros((3, 3, 2, 2, Cin2, 2, 2, 2, 2, Cout), np.float32)
        for ch in range(3):
            for cw in range(3):
                for ap in range(2):
                    for bp in range(2):
                        for a in range(2):
                            for bq in range(2):
                                dh = 2 * ch + ap - a - 1
                                dw = 2 * cw + bp - bq - 1
                                if 0 <= dh <= 2 and 0 <= dw <= 2:
                                    wcb[ch, cw, ap, bp, :, a, bq, :, :, :] = w2[dh, dw]
        Wc[:, :, io:io + 4 * Cin2, oo:oo + 16 * Cout] = \
            wcb.reshape(3, 3, 4 * Cin2, 16 * Cout)
        bias[oo:oo + 16 * Cout] = np.tile(b, 16)
        out_couts.append(Cout)
        io += 4 * Cin2
        oo += 16 * Cout
    return (jnp.asarray(Wc.reshape(9, cin_tot, cout_tot)).astype(jnp.bfloat16),
            jnp.asarray(bias.reshape(1, cout_tot), jnp.float32),
            jnp.ones((1, cout_tot), jnp.float32),               # alpha = 1: no activation
            out_couts)


def _prep_head_block(up_heads, out_heads):
    w0, b0, a0 = _prep_head_up(up_heads)
    w1, b1, a1, out_couts = _prep_head_out(out_heads)
    return {"w0": w0, "b0": b0, "a0": a0, "w1": w1, "b1": b1, "a1": a1,
            "out_couts": out_couts}


def _depth_to_space_x4(z, cout):
    """(N, H, W, 16*cout) with channels ordered [a][b][e][f][co] -> (N, 4H, 4W, cout)."""
    N, H, W, C = z.shape
    assert C == 16 * cout
    z = z.reshape(N, H, W, 2, 2, 2, 2, cout)
    z = jnp.transpose(z, (0, 1, 3, 5, 2, 4, 6, 7))
    return z.reshape(N, 4 * H, 4 * W, cout)


# ---------------------------------------------------------------------------
# Bilinear resize (PyTorch align_corners=False), NHWC.  Identity at scale=1.
# ---------------------------------------------------------------------------
def _src_grid(out_size, in_size):
    s = in_size / out_size
    src = (jnp.arange(out_size, dtype=jnp.float32) + 0.5) * s - 0.5
    src = jnp.clip(src, 0.0, in_size - 1.0)
    i0 = jnp.floor(src).astype(jnp.int32)
    i1 = jnp.minimum(i0 + 1, in_size - 1)
    return i0, i1, src - i0.astype(jnp.float32)


def bilinear_resize_nhwc(x, out_h, out_w):
    N, H, W, C = x.shape
    if out_h == H and out_w == W:
        return x
    y0, y1, fy = _src_grid(out_h, H)
    x0, x1, fx = _src_grid(out_w, W)
    fy = fy[None, :, None, None].astype(x.dtype)
    fx = fx[None, None, :, None].astype(x.dtype)
    r0 = jnp.take(x, y0, axis=1)
    r1 = jnp.take(x, y1, axis=1)
    a = jnp.take(r0, x0, axis=2)
    b = jnp.take(r0, x1, axis=2)
    c_ = jnp.take(r1, x0, axis=2)
    d = jnp.take(r1, x1, axis=2)
    top = a * (1 - fx) + b * fx
    bot = c_ * (1 - fx) + d * fx
    return top * (1 - fy) + bot * fy


# ---------------------------------------------------------------------------
# Parameter init (deterministic synthetic weights, IFBlock shapes)
# ---------------------------------------------------------------------------
def init_params(key, in_planes, c):
    keys = iter(jax.random.split(key, 64))

    def conv_raw(cin, cout):
        w = jax.random.normal(next(keys), (3, 3, cin, cout), jnp.float32) / math.sqrt(cin * 9)
        b = jax.random.normal(next(keys), (cout,), jnp.float32) * 0.01
        a = np.full((cout,), 0.25, np.float32)              # PyTorch PReLU default
        return np.asarray(w), np.asarray(b), a

    def convT_raw(cin, cout):
        w = jax.random.normal(next(keys), (cin, cout, 4, 4), jnp.float32) / math.sqrt(cin * 16)
        b = jax.random.normal(next(keys), (cout,), jnp.float32) * 0.01
        return np.asarray(w), np.asarray(b)

    up1 = convT_raw(c, c // 2)
    up2 = convT_raw(c, c // 2)
    out1 = convT_raw(c // 2, 4)
    out2 = convT_raw(c // 2, 1)
    a_half = np.full((c // 2,), 0.25, np.float32)

    return {
        "conv0": [_prep_stride2(*conv_raw(in_planes, c // 2)),
                  _prep_stride2(*conv_raw(c // 2, c))],
        "blocks": [_prep_double(conv_raw(c, c), conv_raw(c, c)) for _ in range(4)],
        "head": _prep_head_block(
            [(up1[0], up1[1], a_half), (up2[0], up2[1], a_half)],
            [out1, out2]),
    }


# ---------------------------------------------------------------------------
# IFBlock.forward
# ---------------------------------------------------------------------------
def ifblock_forward(params, x, flow, scale=1):
    N, _, H, W = x.shape
    dh, dw = int(round(H / scale)), int(round(W / scale))
    assert dh % 4 == 0 and dw % 4 == 0, "spatial dims must stay divisible by 4"

    # NCHW -> NHWC once; resize (if any) done in NHWC; bf16 activations in HBM.
    xh = jnp.transpose(x, (0, 2, 3, 1))
    fh = jnp.transpose(flow, (0, 2, 3, 1)) * (1.0 / scale)
    feat = jnp.concatenate([xh, fh], axis=-1)
    feat = bilinear_resize_nhwc(feat, dh, dw).astype(jnp.bfloat16)

    feat = stride2_conv(feat, params["conv0"][0])            # (N, dh/2, dw/2, c/2)
    feat = stride2_conv(feat, params["conv0"][1])            # (N, dh/4, dw/4, c)

    for blk in params["blocks"]:                             # 4 fused residual blocks
        feat = double_conv(feat, blk, residual=True)

    # Fused two-branch head (ConvT -> PReLU -> ConvT per branch) in one kernel.
    z = double_conv(feat, params["head"], residual=False, out_dtype=jnp.float32)

    outs, off = [], 0
    for co in params["head"]["out_couts"]:
        outs.append(_depth_to_space_x4(z[..., off:off + 16 * co], co))
        off += 16 * co
    fl, mk = outs                                            # (N, dh, dw, 4), (N, dh, dw, 1)

    fl = bilinear_resize_nhwc(fl, H, W) * float(scale)
    mk = bilinear_resize_nhwc(mk, H, W)
    return (jnp.transpose(fl, (0, 3, 1, 2)),
            jnp.transpose(mk, (0, 3, 1, 2)))


# ---------------------------------------------------------------------------
# Sanity checks of every Pallas path vs XLA references (bf16 inputs/weights)
# ---------------------------------------------------------------------------
def _check_against_xla_reference(key):
    dn = ("NHWC", "HWIO", "NHWC")
    hi = lax.Precision.HIGHEST
    tol = 5e-2
    ks = iter(jax.random.split(key, 16))

    x_bf = jax.random.normal(next(ks), (2, 8, 8, 12), jnp.float32).astype(jnp.bfloat16)
    x32 = x_bf.astype(jnp.float32)

    def rnd(w):                                  # the rounding the bf16 kernel weights see
        return jnp.asarray(w, jnp.float32).astype(jnp.bfloat16).astype(jnp.float32)

    def prelu_ref(y, a):
        return jnp.where(y >= 0.0, y, y * a)

    # 1) stride-2 conv (in-kernel pad + pair-merged phase handling)
    w = np.asarray(jax.random.normal(next(ks), (3, 3, 12, 16)) * 0.1, np.float32)
    b = np.asarray(jax.random.normal(next(ks), (16,)) * 0.01, np.float32)
    al = np.full((16,), 0.25, np.float32)
    got = stride2_conv(x_bf, _prep_stride2(w, b, al)).astype(jnp.float32)
    ref = prelu_ref(lax.conv_general_dilated(
        x32, rnd(w), (2, 2), ((1, 1), (1, 1)), dimension_numbers=dn,
        precision=hi) + b, al)
    assert float(jnp.max(jnp.abs(got - ref))) < tol, "stride-2 conv mismatch"

    # 2) fused residual double-conv block
    w0 = np.asarray(jax.random.normal(next(ks), (3, 3, 12, 12)) * 0.1, np.float32)
    b0 = np.asarray(jax.random.normal(next(ks), (12,)) * 0.01, np.float32)
    w1 = np.asarray(jax.random.normal(next(ks), (3, 3, 12, 12)) * 0.1, np.float32)
    b1 = np.asarray(jax.random.normal(next(ks), (12,)) * 0.01, np.float32)
    a12 = np.full((12,), 0.25, np.float32)
    blk = _prep_double((w0, b0, a12), (w1, b1, a12))
    got = double_conv(x_bf, blk, residual=True).astype(jnp.float32)
    t = prelu_ref(lax.conv_general_dilated(
        x32, rnd(w0), (1, 1), ((1, 1), (1, 1)), dimension_numbers=dn,
        precision=hi) + b0, a12)
    t = t.astype(jnp.bfloat16).astype(jnp.float32)
    ref = prelu_ref(lax.conv_general_dilated(
        t, rnd(w1), (1, 1), ((1, 1), (1, 1)), dimension_numbers=dn,
        precision=hi) + b1, a12) + x32
    assert float(jnp.max(jnp.abs(got - ref))) < tol, "residual block mismatch"

    # 3) full head chain: phase-stacked ConvTranspose -> re-packed ConvTranspose
    #    (consumes the phase-stacked tensor) -> double depth-to-space.
    wt1 = np.asarray(jax.random.normal(next(ks), (12, 6, 4, 4)) * 0.1, np.float32)
    bt1 = np.asarray(jax.random.normal(next(ks), (6,)) * 0.01, np.float32)
    at1 = np.full((6,), 0.25, np.float32)
    wt2 = np.asarray(jax.random.normal(next(ks), (6, 3, 4, 4)) * 0.1, np.float32)
    bt2 = np.asarray(jax.random.normal(next(ks), (3,)) * 0.01, np.float32)
    head = _prep_head_block([(wt1, bt1, at1)], [(wt2, bt2)])
    z = double_conv(x_bf, head, residual=False, out_dtype=jnp.float32)
    got = _depth_to_space_x4(z, 3)
    wf1 = rnd(np.transpose(wt1[:, :, ::-1, ::-1], (2, 3, 0, 1)))
    u = prelu_ref(lax.conv_general_dilated(
        x32, wf1, (1, 1), ((2, 2), (2, 2)), lhs_dilation=(2, 2),
        dimension_numbers=dn, precision=hi) + bt1, at1)
    u = u.astype(jnp.bfloat16).astype(jnp.float32)
    wf2 = rnd(np.transpose(wt2[:, :, ::-1, ::-1], (2, 3, 0, 1)))
    ref = lax.conv_general_dilated(
        u, wf2, (1, 1), ((2, 2), (2, 2)), lhs_dilation=(2, 2),
        dimension_numbers=dn, precision=hi) + bt2
    assert float(jnp.max(jnp.abs(got - ref))) < tol, "head chain mismatch"


if __name__ == "__main__":
    key = jax.random.PRNGKey(0)
    k_x, k_f, k_p, k_chk = jax.random.split(key, 4)

    # x = two stacked RGB frames (6ch), flow = 4ch => in_planes = 10; width c = 48.
    x = jax.random.normal(k_x, (2, 6, 16, 16), jnp.float32)
    flow = jax.random.normal(k_f, (2, 4, 16, 16), jnp.float32)
    params = init_params(k_p, in_planes=10, c=48)

    _check_against_xla_reference(k_chk)

    flow_out, mask_out = ifblock_forward(params, x, flow, scale=1)
    jax.block_until_ready((flow_out, mask_out))

    assert flow_out.shape == (2, 4, 16, 16), flow_out.shape
    assert mask_out.shape == (2, 1, 16, 16), mask_out.shape
    print("KERNEL_OK")
</pallas_src>

<mosaic_0001>
module attributes {stable_mosaic.version = 11 : i64} {
  func.func @_stride2_conv_kernel(%arg0: i32, %arg1: memref<1x8x4x24xbf16, #tpu.memory_space<vmem>>, %arg2: memref<6x24x16xbf16, #tpu.memory_space<vmem>>, %arg3: memref<1x16xf32, #tpu.memory_space<vmem>>, %arg4: memref<1x16xf32, #tpu.memory_space<vmem>>, %arg5: memref<1x16x16xbf16, #tpu.memory_space<vmem>>, %arg6: memref<10x5x24xbf16, #tpu.memory_space<vmem>>) attributes {dimension_semantics = [#tpu.dimension_semantics<parallel>], iteration_bounds = array<i64: 2>, scalar_prefetch = 0 : i64, scratch_operands = 1 : i64, tpu.core_type = #tpu.core_type<tc>, window_params = [{transform_indices = @transform_0, window_bounds = array<i64: 1, 8, 4, 24>}, {pipeline_mode = #tpu.pipeline_mode<synchronous>, transform_indices = @transform_1, window_bounds = array<i64: 6, 24, 16>}, {pipeline_mode = #tpu.pipeline_mode<synchronous>, transform_indices = @transform_2, window_bounds = array<i64: 1, 16>}, {pipeline_mode = #tpu.pipeline_mode<synchronous>, transform_indices = @transform_3, window_bounds = array<i64: 1, 16>}, {transform_indices = @transform_4, window_bounds = array<i64: 1, 16, 16>}]} {
    %cst = arith.constant 0.000000e+00 : bf16
    %0 = vector.broadcast %cst : bf16 to vector<10x5x24xbf16>
    %c0 = arith.constant 0 : index
    %c0_0 = arith.constant 0 : index
    %c0_1 = arith.constant 0 : index
    %1 = vector.load %arg6[%c0, %c0_0, %c0_1] : memref<10x5x24xbf16, #tpu.memory_space<vmem>>, vector<10x5x24xbf16>
    tpu.vector_store %arg6[%c0, %c0_0, %c0_1], %0 {strides = array<i32>} : memref<10x5x24xbf16, #tpu.memory_space<vmem>>, vector<10x5x24xbf16>,
    %c0_2 = arith.constant 0 : index
    %c0_3 = arith.constant 0 : index
    %c0_4 = arith.constant 0 : index
    %c0_5 = arith.constant 0 : index
    %2 = vector.load %arg1[%c0_2, %c0_3, %c0_4, %c0_5] : memref<1x8x4x24xbf16, #tpu.memory_space<vmem>>, vector<1x8x4x24xbf16>
    %3 = vector.shape_cast %2 : vector<1x8x4x24xbf16> to vector<8x4x24xbf16>
    %c1 = arith.constant 1 : index
    %c1_6 = arith.constant 1 : index
    %c0_7 = arith.constant 0 : index
    %4 = vector.load %arg6[%c1, %c1_6, %c0_7] : memref<10x5x24xbf16, #tpu.memory_space<vmem>>, vector<8x4x24xbf16>
    tpu.vector_store %arg6[%c1, %c1_6, %c0_7], %3 {strides = array<i32>} : memref<10x5x24xbf16, #tpu.memory_space<vmem>>, vector<8x4x24xbf16>,
    %c0_8 = arith.constant 0 : index
    %c0_9 = arith.constant 0 : index
    %c0_10 = arith.constant 0 : index
    %5 = vector.load %arg6[%c0_8, %c0_9, %c0_10] : memref<10x5x24xbf16, #tpu.memory_space<vmem>>, vector<10x5x24xbf16>
    %6 = vector.shape_cast %5 : vector<10x5x24xbf16> to vector<5x2x5x24xbf16>
    %c0_11 = arith.constant 0 : index
    %c0_12 = arith.constant 0 : index
    %c0_13 = arith.constant 0 : index
    %7 = vector.load %arg2[%c0_11, %c0_12, %c0_13] : memref<6x24x16xbf16, #tpu.memory_space<vmem>>, vector<6x24x16xbf16>
    %cst_14 = arith.constant 0.000000e+00 : f32
    %8 = vector.broadcast %cst_14 : f32 to vector<16x16xf32>
    %9 = vector.extract_strided_slice %6 {offsets = [0, 0, 0, 0], sizes = [4, 1, 5, 24], strides = [1, 1, 1, 1]} : vector<5x2x5x24xbf16> to vector<4x1x5x24xbf16>
    %10 = vector.shape_cast %9 : vector<4x1x5x24xbf16> to vector<4x5x24xbf16>
    %11 = vector.extract_strided_slice %10 {offsets = [0, 0, 0], sizes = [4, 4, 24], strides = [1, 1, 1]} : vector<4x5x24xbf16> to vector<4x4x24xbf16>
    %12 = vector.shape_cast %11 : vector<4x4x24xbf16> to vector<16x24xbf16>
    %13 = vector.extract_strided_slice %7 {offsets = [0, 0, 0], sizes = [1, 24, 16], strides = [1, 1, 1]} : vector<6x24x16xbf16> to vector<1x24x16xbf16>
    %14 = vector.shape_cast %13 : vector<1x24x16xbf16> to vector<24x16xbf16>
    %cst_15 = arith.constant dense<0.000000e+00> : vector<16x16xf32>
    %15 = tpu.matmul %12, %14, %cst_15 {dimension_numbers = #tpu.dot_dimension_numbers<[1], [0], [0], [1], [0, 0, 1, 1], [], []>} : vector<16x24xbf16>, vector<24x16xbf16>, vector<16x16xf32> -> vector<16x16xf32>
    %16 = arith.addf %8, %15 : vector<16x16xf32>
    %17 = vector.extract_strided_slice %10 {offsets = [0, 1, 0], sizes = [4, 4, 24], strides = [1, 1, 1]} : vector<4x5x24xbf16> to vector<4x4x24xbf16>
    %18 = vector.shape_cast %17 : vector<4x4x24xbf16> to vector<16x24xbf16>
    %19 = vector.extract_strided_slice %7 {offsets = [1, 0, 0], sizes = [1, 24, 16], strides = [1, 1, 1]} : vector<6x24x16xbf16> to vector<1x24x16xbf16>
    %20 = vector.shape_cast %19 : vector<1x24x16xbf16> to vector<24x16xbf16>
    %cst_16 = arith.constant dense<0.000000e+00> : vector<16x16xf32>
    %21 = tpu.matmul %18, %20, %cst_16 {dimension_numbers = #tpu.dot_dimension_numbers<[1], [0], [0], [1], [0, 0, 1, 1], [], []>} : vector<16x24xbf16>, vector<24x16xbf16>, vector<16x16xf32> -> vector<16x16xf32>
    %22 = arith.addf %16, %21 : vector<16x16xf32>
    %23 = vector.extract_strided_slice %6 {offsets = [0, 1, 0, 0], sizes = [4, 1, 5, 24], strides = [1, 1, 1, 1]} : vector<5x2x5x24xbf16> to vector<4x1x5x24xbf16>
    %24 = vector.shape_cast %23 : vector<4x1x5x24xbf16> to vector<4x5x24xbf16>
    %25 = vector.extract_strided_slice %24 {offsets = [0, 0, 0], sizes = [4, 4, 24], strides = [1, 1, 1]} : vector<4x5x24xbf16> to vector<4x4x24xbf16>
    %26 = vector.shape_cast %25 : vector<4x4x24xbf16> to vector<16x24xbf16>
    %27 = vector.extract_strided_slice %7 {offsets = [2, 0, 0], sizes = [1, 24, 16], strides = [1, 1, 1]} : vector<6x24x16xbf16> to vector<1x24x16xbf16>
    %28 = vector.shape_cast %27 : vector<1x24x16xbf16> to vector<24x16xbf16>
    %cst_17 = arith.constant dense<0.000000e+00> : vector<16x16xf32>
    %29 = tpu.matmul %26, %28, %cst_17 {dimension_numbers = #tpu.dot_dimension_numbers<[1], [0], [0], [1], [0, 0, 1, 1], [], []>} : vector<16x24xbf16>, vector<24x16xbf16>, vector<16x16xf32> -> vector<16x16xf32>
    %30 = arith.addf %22, %29 : vector<16x16xf32>
    %31 = vector.extract_strided_slice %24 {offsets = [0, 1, 0], sizes = [4, 4, 24], strides = [1, 1, 1]} : vector<4x5x24xbf16> to vector<4x4x24xbf16>
    %32 = vector.shape_cast %31 : vector<4x4x24xbf16> to vector<16x24xbf16>
    %33 = vector.extract_strided_slice %7 {offsets = [3, 0, 0], sizes = [1, 24, 16], strides = [1, 1, 1]} : vector<6x24x16xbf16> to vector<1x24x16xbf16>
    %34 = vector.shape_cast %33 : vector<1x24x16xbf16> to vector<24x16xbf16>
    %cst_18 = arith.constant dense<0.000000e+00> : vector<16x16xf32>
    %35 = tpu.matmul %32, %34, %cst_18 {dimension_numbers = #tpu.dot_dimension_numbers<[1], [0], [0], [1], [0, 0, 1, 1], [], []>} : vector<16x24xbf16>, vector<24x16xbf16>, vector<16x16xf32> -> vector<16x16xf32>
    %36 = arith.addf %30, %35 : vector<16x16xf32>
    %37 = vector.extract_strided_slice %6 {offsets = [1, 0, 0, 0], sizes = [4, 1, 5, 24], strides = [1, 1, 1, 1]} : vector<5x2x5x24xbf16> to vector<4x1x5x24xbf16>
    %38 = vector.shape_cast %37 : vector<4x1x5x24xbf16> to vector<4x5x24xbf16>
    %39 = vector.extract_strided_slice %38 {offsets = [0, 0, 0], sizes = [4, 4, 24], strides = [1, 1, 1]} : vector<4x5x24xbf16> to vector<4x4x24xbf16>
    %40 = vector.shape_cast %39 : vector<4x4x24xbf16> to vector<16x24xbf16>
    %41 = vector.extract_strided_slice %7 {offsets = [4, 0, 0], sizes = [1, 24, 16], strides = [1, 1, 1]} : vector<6x24x16xbf16> to vector<1x24x16xbf16>
    %42 = vector.shape_cast %41 : vector<1x24x16xbf16> to vector<24x16xbf16>
    %cst_19 = arith.constant dense<0.000000e+00> : vector<16x16xf32>
    %43 = tpu.matmul %40, %42, %cst_19 {dimension_numbers = #tpu.dot_dimension_numbers<[1], [0], [0], [1], [0, 0, 1, 1], [], []>} : vector<16x24xbf16>, vector<24x16xbf16>, vector<16x16xf32> -> vector<16x16xf32>
    %44 = arith.addf %36, %43 : vector<16x16xf32>
    %45 = vector.extract_strided_slice %38 {offsets = [0, 1, 0], sizes = [4, 4, 24], strides = [1, 1, 1]} : vector<4x5x24xbf16> to vector<4x4x24xbf16>
    %46 = vector.shape_cast %45 : vector<4x4x24xbf16> to vector<16x24xbf16>
    %47 = vector.extract_strided_slice %7 {offsets = [5, 0, 0], sizes = [1, 24, 16], strides = [1, 1, 1]} : vector<6x24x16xbf16> to vector<1x24x16xbf16>
    %48 = vector.shape_cast %47 : vector<1x24x16xbf16> to vector<24x16xbf16>
    %cst_20 = arith.constant dense<0.000000e+00> : vector<16x16xf32>
    %49 = tpu.matmul %46, %48, %cst_20 {dimension_numbers = #tpu.dot_dimension_numbers<[1], [0], [0], [1], [0, 0, 1, 1], [], []>} : vector<16x24xbf16>, vector<24x16xbf16>, vector<16x16xf32> -> vector<16x16xf32>
    %50 = arith.addf %44, %49 : vector<16x16xf32>
    %c0_21 = arith.constant 0 : index
    %c0_22 = arith.constant 0 : index
    %51 = vector.load %arg3[%c0_21, %c0_22] : memref<1x16xf32, #tpu.memory_space<vmem>>, vector<1x16xf32>
    %52 = vector.broadcast %51 : vector<1x16xf32> to vector<16x16xf32>
    %53 = arith.addf %50, %52 : vector<16x16xf32>
    %c0_23 = arith.constant 0 : index
    %c0_24 = arith.constant 0 : index
    %54 = vector.load %arg4[%c0_23, %c0_24] : memref<1x16xf32, #tpu.memory_space<vmem>>, vector<1x16xf32>
    %cst_25 = arith.constant 0.000000e+00 : f32
    %55 = vector.broadcast %cst_25 : f32 to vector<16x16xf32>
    %56 = arith.cmpf oge, %53, %55 : vector<16x16xf32>
    %57 = vector.broadcast %54 : vector<1x16xf32> to vector<16x16xf32>
    %58 = arith.mulf %53, %57 : vector<16x16xf32>
    %59 = arith.select %56, %53, %58 : vector<16x16xi1>, vector<16x16xf32>
    %60 = arith.truncf %59 : vector<16x16xf32> to vector<16x16xbf16>
    %c0_26 = arith.constant 0 : index
    %c0_27 = arith.constant 0 : index
    %c0_28 = arith.constant 0 : index
    %61 = vector.load %arg5[%c0_26, %c0_27, %c0_28] : memref<1x16x16xbf16, #tpu.memory_space<vmem>>, vector<1x16x16xbf16>
    %62 = vector.shape_cast %61 : vector<1x16x16xbf16> to vector<16x16xbf16>
    %63 = vector.shape_cast %60 : vector<16x16xbf16> to vector<1x16x16xbf16>
    tpu.vector_store %arg5[%c0_26, %c0_27, %c0_28], %63 {strides = array<i32>} : memref<1x16x16xbf16, #tpu.memory_space<vmem>>, vector<1x16x16xbf16>,
    return
  }
  func.func @transform_0(%arg0: i32) -> (i32, i32, i32, i32) {
    %c0_i32 = arith.constant 0 : i32
    %c0_i32_0 = arith.constant 0 : i32
    %c0_i32_1 = arith.constant 0 : i32
    %c0_i32_2 = arith.constant 0 : i32
    return %arg0, %c0_i32, %c0_i32_0, %c0_i32_1 : i32, i32, i32, i32
  }
  func.func @transform_1(%arg0: i32) -> (i32, i32, i32) {
    %c0_i32 = arith.constant 0 : i32
    %c0_i32_0 = arith.constant 0 : i32
    %c0_i32_1 = arith.constant 0 : i32
    %c0_i32_2 = arith.constant 0 : i32
    return %c0_i32, %c0_i32_0, %c0_i32_1 : i32, i32, i32
  }
  func.func @transform_2(%arg0: i32) -> (i32, i32) {
    %c0_i32 = arith.constant 0 : i32
    %c0_i32_0 = arith.constant 0 : i32
    %c0_i32_1 = arith.constant 0 : i32
    return %c0_i32, %c0_i32_0 : i32, i32
  }
  func.func @transform_3(%arg0: i32) -> (i32, i32) {
    %c0_i32 = arith.constant 0 : i32
    %c0_i32_0 = arith.constant 0 : i32
    %c0_i32_1 = arith.constant 0 : i32
    return %c0_i32, %c0_i32_0 : i32, i32
  }
  func.func @transform_4(%arg0: i32) -> (i32, i32, i32) {
    %c0_i32 = arith.constant 0 : i32
    %c0_i32_0 = arith.constant 0 : i32
    %c0_i32_1 = arith.constant 0 : i32
    return %arg0, %c0_i32, %c0_i32_0 : i32, i32, i32
  }
}

</mosaic_0001>

<llo_original>
// kernel: tpu_custom_call.1
$region0: #{tpu_custom_call.1}
  #allocation0 [shape = 'u32[]', space=smem, size = 0x4, offset = 0x4, fixed_abs, tag = 'smem constant byte address 0x4 - core index']
  #allocation1 [shape = 'u32[144,128]{1,0:T(1,128)}', space=vmem, size = 0x12000, scoped, tag = 'internal scratch']
  #allocation2 [shape = 'bf16[10,5,24]{2,1,0:T(8,128)(2,1)}', space=vmem, size = 0x5000, scoped, tag = 'scratch operand']
  %s0 = inlined_call_operand.vmem [shape: bf16[2,8,4,24], index: 0, kind: input, shape index: {}]
  %s1 = inlined_call_operand.vmem [shape: bf16[6,24,16], index: 1, kind: input, shape index: {}]
  %s2 = inlined_call_operand.vmem [shape: f32[1,16], index: 2, kind: input, shape index: {}]
  %s3 = inlined_call_operand.vmem [shape: f32[1,16], index: 3, kind: input, shape index: {}]
  %s4 = inlined_call_operand.hbm [shape: bf16[2,16,16], index: 4, kind: output, shape index: {}]
  %s5 = sld [smem:[#allocation0]]
  $region49: #{tpu_custom_call.1} parent=0
    _
  %s7 = ssub.s32 1, %s5
  %s8 = scalar_select 0, %s7, %s5
  $region1: #{tpu_custom_call.1} parent=0
    #allocation3 [shape = 'u8[8192]{0}', space=vmem, size = 0x2000, scoped, tag = 'output window, operand 0']
    #allocation4 [shape = 's32[2]{0}', space=sflag, size = 0x8, scoped, tag = 'scoped memory for tpu_custom_call.1']
    %9 = vsyncpa [#allocation4], 0
    %s10 = scalar_lea.sflag [#allocation4], 1
    %11 = vsyncpa %s10, 0
    loop: start=0, step=1, limit=4
    $region2: #{tpu_custom_call.1} parent=1 // loop_pre_header
      _
    $region3: #{tpu_custom_call.1} parent=1 // loop_header
      %s13 = sphi 0, %s17
      %p14 = scmp.ge.s32.totalorder %s13, 4
      %s23 = sphi 0, %s25
      %s26 = sphi 0, %s23
      %s27 = sphi 0, %s26
      %s43 = sphi 0, %s27
      %s47 = sphi 0, %s47
      %s49 = sphi 0, %s47
      %s50 = sphi 0, %s49
      %s64 = sphi 0, %s50
      %s68 = sphi 0, %s68
      %s70 = sphi 0, %s68
      %s71 = sphi 0, %s70
      %s85 = sphi 0, %s71
      %s89 = sphi 0, %s89
      %s91 = sphi 0, %s89
      %s92 = sphi 0, %s91
      %s106 = sphi 0, %s92
      %s112 = sphi 0, %s114
      %s115 = sphi 0, %s112
      %s116 = sphi 0, %s115
      %s132 = sphi 0, %s116
    $region4: #{tpu_custom_call.1} parent=1 // loop_header_branch
      %16 = sbr.rel (%p14) target = $region8
    $region5: #{tpu_custom_call.1} parent=1 // loop_body
      %s18 = ssub.s32 %s13, 1
      %s19 = ssub.s32 %s13, 2
      %s20 = sadd.s32 %s13, 1
      %s21 = ssub.s32 %s13, %s20
      %p22 = scmp.eq.s32.totalorder %s21, 0
      %s24 = sadd.s32 %s23, 1
      %s25 = scalar_select %p22, %s23, %s24
      %p28 = pneg %p22
      %p29 = scmp.eq.s32.totalorder %s13, 1
      %p30 = por %p28, %p29
      %p31 = scmp.ne.s32.totalorder %s23, %s26
      %p32 = scmp.eq.s32.totalorder %s13, 0
      %p33 = por %p31, %p32
      %p34 = scmp.ne.s32.totalorder %s23, %s26
      %p35 = scmp.eq.s32.totalorder %s18, 1
      %p36 = por %p34, %p35
      %p37 = scmp.ne.s32.totalorder %s26, %s27
      %p38 = scmp.eq.s32.totalorder %s18, 0
      %p39 = por %p37, %p38
      %p40 = scmp.ne.s32.totalorder %s26, %s27
      %p41 = scmp.eq.s32.totalorder %s19, 1
      %p42 = por %p40, %p41
      %p44 = scmp.ne.s32.totalorder %s27, %s43
      %p45 = scmp.eq.s32.totalorder %s19, 0
      %p46 = por %p44, %p45
      %s48 = sadd.s32 %s47, 1
      %p51 = scmp.eq.s32.totalorder %s13, 1
      %p52 = scmp.ne.s32.totalorder %s47, %s49
      %p53 = scmp.eq.s32.totalorder %s13, 0
      %p54 = por %p52, %p53
      %p55 = scmp.ne.s32.totalorder %s47, %s49
      %p56 = scmp.eq.s32.totalorder %s18, 1
      %p57 = por %p55, %p56
      %p58 = scmp.ne.s32.totalorder %s49, %s50
      %p59 = scmp.eq.s32.totalorder %s18, 0
      %p60 = por %p58, %p59
      %p61 = scmp.ne.s32.totalorder %s49, %s50
      %p62 = scmp.eq.s32.totalorder %s19, 1
      %p63 = por %p61, %p62
      %p65 = scmp.ne.s32.totalorder %s50, %s64
      %p66 = scmp.eq.s32.totalorder %s19, 0
      %p67 = por %p65, %p66
      %s69 = sadd.s32 %s68, 1
      %p72 = scmp.eq.s32.totalorder %s13, 1
      %p73 = scmp.ne.s32.totalorder %s68, %s70
      %p74 = scmp.eq.s32.totalorder %s13, 0
      %p75 = por %p73, %p74
      %p76 = scmp.ne.s32.totalorder %s68, %s70
      %p77 = scmp.eq.s32.totalorder %s18, 1
      %p78 = por %p76, %p77
      %p79 = scmp.ne.s32.totalorder %s70, %s71
      %p80 = scmp.eq.s32.totalorder %s18, 0
      %p81 = por %p79, %p80
      %p82 = scmp.ne.s32.totalorder %s70, %s71
      %p83 = scmp.eq.s32.totalorder %s19, 1
      %p84 = por %p82, %p83
      %p86 = scmp.ne.s32.totalorder %s71, %s85
      %p87 = scmp.eq.s32.totalorder %s19, 0
      %p88 = por %p86, %p87
      %s90 = sadd.s32 %s89, 1
      %p93 = scmp.eq.s32.totalorder %s13, 1
      %p94 = scmp.ne.s32.totalorder %s89, %s91
      %p95 = scmp.eq.s32.totalorder %s13, 0
      %p96 = por %p94, %p95
      %p97 = scmp.ne.s32.totalorder %s89, %s91
      %p98 = scmp.eq.s32.totalorder %s18, 1
      %p99 = por %p97, %p98
      %p100 = scmp.ne.s32.totalorder %s91, %s92
      %p101 = scmp.eq.s32.totalorder %s18, 0
      %p102 = por %p100, %p101
      %p103 = scmp.ne.s32.totalorder %s91, %s92
      %p104 = scmp.eq.s32.totalorder %s19, 1
      %p105 = por %p103, %p104
      %p107 = scmp.ne.s32.totalorder %s92, %s106
      %p108 = scmp.eq.s32.totalorder %s19, 0
      %p109 = por %p107, %p108
      %s110 = ssub.s32 %s13, %s20
      %p111 = scmp.eq.s32.totalorder %s110, 0
      %s113 = sadd.s32 %s112, 1
      %s114 = scalar_select %p111, %s112, %s113
      %p117 = pneg %p111
      %p118 = scmp.eq.s32.totalorder %s13, 1
      %p119 = por %p117, %p118
      %p120 = scmp.ne.s32.totalorder %s112, %s115
      %p121 = scmp.eq.s32.totalorder %s13, 0
      %p122 = por %p120, %p121
      %p123 = scmp.ne.s32.totalorder %s112, %s115
      %p124 = scmp.eq.s32.totalorder %s18, 1
      %p125 = por %p123, %p124
      %p126 = scmp.ne.s32.totalorder %s115, %s116
      %p127 = scmp.eq.s32.totalorder %s18, 0
      %p128 = por %p126, %p127
      %p129 = scmp.ne.s32.totalorder %s115, %s116
      %p130 = scmp.eq.s32.totalorder %s19, 1
      %p131 = por %p129, %p130
      %p133 = scmp.ne.s32.totalorder %s116, %s132
      %p134 = scmp.eq.s32.totalorder %s19, 0
      %p135 = por %p133, %p134
      %p136 = scmp.le.s32.totalorder 1, %s13
      %p137 = scmp.lt.s32.totalorder %s13, 3
      %p138 = pnand %p136, %p137
      %p139 = pneg %p138
      // Predicated region
      $region9: #{tpu_custom_call.1} parent=5 // pred_check
        _
      $region10: #{tpu_custom_call.1} parent=5 // pred_check_branch
        %141 = sbr.rel (%p138) target = $region12
      $region11: #{tpu_custom_call.1} parent=5 // pred_region
        %s142 = ssub.s32 %s13, 1
        // Predicated region
        $region13: #{tpu_custom_call.1} parent=11 // pred_check
          %p143 = pneg %p60
        $region14: #{tpu_custom_call.1} parent=11 // pred_check_branch
          %145 = sbr.rel (%p143) target = $region16
        $region15: #{tpu_custom_call.1} parent=11 // pred_region
          _
        $region16: #{tpu_custom_call.1} parent=11 // pred_fallthru
          _
        // Predicated region
        $region17: #{tpu_custom_call.1} parent=11 // pred_check
          %p146 = pneg %p81
        $region18: #{tpu_custom_call.1} parent=11 // pred_check_branch
          %148 = sbr.rel (%p146) target = $region20
        $region19: #{tpu_custom_call.1} parent=11 // pred_region
          _
        $region20: #{tpu_custom_call.1} parent=11 // pred_fallthru
          _
        // Predicated region
        $region21: #{tpu_custom_call.1} parent=11 // pred_check
          %p149 = pneg %p102
        $region22: #{tpu_custom_call.1} parent=11 // pred_check_branch
          %151 = sbr.rel (%p149) target = $region24
        $region23: #{tpu_custom_call.1} parent=11 // pred_region
          _
        $region24: #{tpu_custom_call.1} parent=11 // pred_fallthru
          _
      $region12: #{tpu_custom_call.1} parent=5 // pred_fallthru
        _
      %p152 = scmp.lt.s32.totalorder %s13, 2
      // Predicated region
      $region25: #{tpu_custom_call.1} parent=5 // pred_check
        %p153 = pneg %p152
      $region26: #{tpu_custom_call.1} parent=5 // pred_check_branch
        %155 = sbr.rel (%p153) target = $region28
      $region27: #{tpu_custom_call.1} parent=5 // pred_region
        // Predicated region
        $region29: #{tpu_custom_call.1} parent=27 // pred_check
          %p156 = pneg %p33
        $region30: #{tpu_custom_call.1} parent=27 // pred_check_branch
          %158 = sbr.rel (%p156) target = $region32
        $region31: #{tpu_custom_call.1} parent=27 // pred_region
          %p159 = scmp.lt.s32.totalorder %s13, 1
          %s160 = scalar_select %p159, %s13, 1
          %s161 = smul.addr %s160, 8
          %s162 = smul.addr %s161, 2
          %s163 = scalar_lea.vmem %s0, %s162
        $region32: #{tpu_custom_call.1} parent=27 // pred_fallthru
          _
      $region28: #{tpu_custom_call.1} parent=5 // pred_fallthru
        _
      %p164 = scmp.le.s32.totalorder 1, %s13
      %p165 = scmp.lt.s32.totalorder %s13, 3
      %p166 = pnand %p164, %p165
      %p167 = pneg %p166
      // Predicated region
      $region33: #{tpu_custom_call.1} parent=5 // pred_check
        _
      $region34: #{tpu_custom_call.1} parent=5 // pred_check_branch
        %169 = sbr.rel (%p166) target = $region36
      $region35: #{tpu_custom_call.1} parent=5 // pred_region
        %s170 = ssub.s32 %s13, 1
        %p171 = scmp.lt.s32.totalorder %s18, 1
        %s172 = scalar_select %p171, %s18, 1
        %s173 = smul.addr %s172, 8
        %s174 = smul.addr %s173, 2
        %s175 = scalar_lea.vmem %s0, %s174
        %p176 = pneg %p39
        %p177 = pneg %p36
        %p178 = pneg %p60
        %p179 = pneg %p57
        %p180 = pneg %p81
        %p181 = pneg %p78
        %p182 = pneg %p102
        %p183 = pneg %p99
        %p184 = pneg %p128
        %p185 = pneg %p125
        %s186 = sand.u32 %s115, 1
        %s187 = scalar_lea.sflag [#allocation4], %s186
        %s188 = sand.u32 %s115, 1
        %s189 = smul.addr %s188, 8
        %s190 = scalar_lea.vmem [#allocation3], %s189
        %p191 = scmp.lt.s32.totalorder %s18, 1
        %s192 = scalar_select %p191, %s18, 1
        %s193 = smul.addr %s192, 8
        %s194 = smul.addr %s193, 2
        %s195 = scalar_lea.vmem %s0, %s194
        %vm197 = vcmask 190464
        %vm198 = vsmask.f32 2304
        %vm199 = vmand %vm197, %vm198
        %v200 = vld [vmem:[#allocation2] sm:$0x7]
        %v201 = vsel %vm199, 0, %v200
        %202 = vst [vmem:[#allocation2] sm:$0x7] %v201
        %v203 = vld [vmem:[#allocation2 + $0x4] sm:$0x7]
        %v204 = vsel %vm199, 0, %v203
        %205 = vst [vmem:[#allocation2 + $0x4] sm:$0x7] %v204
        %v206 = vld [vmem:[#allocation2 + $0x8] sm:$0x7]
        %v207 = vsel %vm199, 0, %v206
        %208 = vst [vmem:[#allocation2 + $0x8] sm:$0x7] %v207
        %v209 = vld [vmem:[#allocation2 + $0xc] sm:$0x7]
        %v210 = vsel %vm199, 0, %v209
        %211 = vst [vmem:[#allocation2 + $0xc] sm:$0x7] %v210
        %v212 = vld [vmem:[#allocation2 + $0x10] sm:$0x7]
        %v213 = vsel %vm199, 0, %v212
        %214 = vst [vmem:[#allocation2 + $0x10] sm:$0x7] %v213
        %v215 = vld [vmem:[#allocation2 + $0x14] sm:$0x7]
        %v216 = vsel %vm199, 0, %v215
        %217 = vst [vmem:[#allocation2 + $0x14] sm:$0x7] %v216
        %v218 = vld [vmem:[#allocation2 + $0x18] sm:$0x7]
        %v219 = vsel %vm199, 0, %v218
        %220 = vst [vmem:[#allocation2 + $0x18] sm:$0x7] %v219
        %v221 = vld [vmem:[#allocation2 + $0x1c] sm:$0x7]
        %v222 = vsel %vm199, 0, %v221
        %223 = vst [vmem:[#allocation2 + $0x1c] sm:$0x7] %v222
        %v224 = vld [vmem:[#allocation2 + $0x20] sm:$0x7]
        %v225 = vsel %vm199, 0, %v224
        %226 = vst [vmem:[#allocation2 + $0x20] sm:$0x7] %v225
        %v227 = vld [vmem:[#allocation2 + $0x24] sm:$0x7]
        %v228 = vsel %vm199, 0, %v227
        %229 = vst [vmem:[#allocation2 + $0x24] sm:$0x7] %v228
        %v230 = vld [vmem:[%s195] sm:$0x3]
        %v231 = vld [vmem:[%s195 + $0x2] sm:$0x3]
        %v232 = vld [vmem:[%s195 + $0x4] sm:$0x3]
        %v233 = vld [vmem:[%s195 + $0x6] sm:$0x3]
        %v234 = vld [vmem:[%s195 + $0x8] sm:$0x3]
        %v235 = vld [vmem:[%s195 + $0xa] sm:$0x3]
        %v236 = vld [vmem:[%s195 + $0xc] sm:$0x3]
        %v237 = vld [vmem:[%s195 + $0xe] sm:$0x3]
        %v247 = vunpack.c.l.s4 1983009808
        %v248 = vunpack.c.0.s8 %v247
        %v249 = vlaneseq
        %v250 = vshrl.u32 %v249, 7
        %v251 = vsub.s32 %v248, %v250
        %v252 = vrot.slane %v230, %v251
        %v254 = vunpack.c.l.s4 1983009808
        %v255 = vunpack.c.0.s8 %v254
        %v256 = vlaneseq
        %v257 = vshrl.u32 %v256, 7
        %v258 = vsub.s32 %v255, %v257
        %v259 = vrot.slane %v231, %v258
        %v261 = vunpack.c.l.s4 1983009808
        %v262 = vunpack.c.0.s8 %v261
        %v263 = vlaneseq
        %v264 = vshrl.u32 %v263, 7
        %v265 = vsub.s32 %v262, %v264
        %v266 = vrot.slane %v232, %v265
        %v268 = vunpack.c.l.s4 1983009808
        %v269 = vunpack.c.0.s8 %v268
        %v270 = vlaneseq
        %v271 = vshrl.u32 %v270, 7
        %v272 = vsub.s32 %v269, %v271
        %v273 = vrot.slane %v233, %v272
        %v275 = vunpack.c.l.s4 1983009808
        %v276 = vunpack.c.0.s8 %v275
        %v277 = vlaneseq
        %v278 = vshrl.u32 %v277, 7
        %v279 = vsub.s32 %v276, %v278
        %v280 = vrot.slane %v234, %v279
        %v282 = vunpack.c.l.s4 1983009808
        %v283 = vunpack.c.0.s8 %v282
        %v284 = vlaneseq
        %v285 = vshrl.u32 %v284, 7
        %v286 = vsub.s32 %v283, %v285
        %v287 = vrot.slane %v235, %v286
        %v289 = vunpack.c.l.s4 1983009808
        %v290 = vunpack.c.0.s8 %v289
        %v291 = vlaneseq
        %v292 = vshrl.u32 %v291, 7
        %v293 = vsub.s32 %v290, %v292
        %v294 = vrot.slane %v236, %v293
        %v296 = vunpack.c.l.s4 1983009808
        %v297 = vunpack.c.0.s8 %v296
        %v298 = vlaneseq
        %v299 = vshrl.u32 %v298, 7
        %v300 = vsub.s32 %v297, %v299
        %v301 = vrot.slane %v237, %v300
        %v303 = vshrl.u32 %v252, 16
        %v305 = vrot.slane %v303, 7
        %v306 = vshll.u32 %v252, 16
        %v308 = vor.u32 %v305, %v306
        %v310 = vshrl.u32 %v259, 16
        %v312 = vrot.slane %v310, 7
        %v313 = vshll.u32 %v259, 16
        %v315 = vor.u32 %v312, %v313
        %v317 = vshrl.u32 %v266, 16
        %v319 = vrot.slane %v317, 7
        %v320 = vshll.u32 %v266, 16
        %v322 = vor.u32 %v319, %v320
        %v324 = vshrl.u32 %v273, 16
        %v326 = vrot.slane %v324, 7
        %v327 = vshll.u32 %v273, 16
        %v329 = vor.u32 %v326, %v327
        %v331 = vshrl.u32 %v280, 16
        %v333 = vrot.slane %v331, 7
        %v334 = vshll.u32 %v280, 16
        %v336 = vor.u32 %v333, %v334
        %v338 = vshrl.u32 %v287, 16
        %v340 = vrot.slane %v338, 7
        %v341 = vshll.u32 %v287, 16
        %v343 = vor.u32 %v340, %v341
        %v345 = vshrl.u32 %v294, 16
        %v347 = vrot.slane %v345, 7
        %v348 = vshll.u32 %v294, 16
        %v350 = vor.u32 %v347, %v348
        %v352 = vshrl.u32 %v301, 16
        %v354 = vrot.slane %v352, 7
        %v355 = vshll.u32 %v301, 16
        %v357 = vor.u32 %v354, %v355
        %s366 = scalar_lea.vmem [#allocation2], 4
        %vm367 = vsmask.f32 2306
        %vm368 = vmand %vm197, %vm367
        %v369 = vld [vmem:[%s366] sm:$0x7]
        %v370 = vsel %vm368, %v308, %v369
        %371 = vst [vmem:[%s366] sm:$0x7] %v370
        %v372 = vld [vmem:[%s366 + $0x4] sm:$0x7]
        %v373 = vsel %vm368, %v315, %v372
        %374 = vst [vmem:[%s366 + $0x4] sm:$0x7] %v373
        %v375 = vld [vmem:[%s366 + $0x8] sm:$0x7]
        %v376 = vsel %vm368, %v322, %v375
        %377 = vst [vmem:[%s366 + $0x8] sm:$0x7] %v376
        %v378 = vld [vmem:[%s366 + $0xc] sm:$0x7]
        %v379 = vsel %vm368, %v329, %v378
        %380 = vst [vmem:[%s366 + $0xc] sm:$0x7] %v379
        %v381 = vld [vmem:[%s366 + $0x10] sm:$0x7]
        %v382 = vsel %vm368, %v336, %v381
        %383 = vst [vmem:[%s366 + $0x10] sm:$0x7] %v382
        %v384 = vld [vmem:[%s366 + $0x14] sm:$0x7]
        %v385 = vsel %vm368, %v343, %v384
        %386 = vst [vmem:[%s366 + $0x14] sm:$0x7] %v385
        %v387 = vld [vmem:[%s366 + $0x18] sm:$0x7]
        %v388 = vsel %vm368, %v350, %v387
        %389 = vst [vmem:[%s366 + $0x18] sm:$0x7] %v388
        %v390 = vld [vmem:[%s366 + $0x1c] sm:$0x7]
        %v391 = vsel %vm368, %v357, %v390
        %392 = vst [vmem:[%s366 + $0x1c] sm:$0x7] %v391
        %v393 = vld [vmem:[#allocation2] sm:$0x7]
        %v394 = vld [vmem:[#allocation2 + $0x4] sm:$0x7]
        %v395 = vld [vmem:[#allocation2 + $0x8] sm:$0x7]
        %v396 = vld [vmem:[#allocation2 + $0xc] sm:$0x7]
        %v397 = vld [vmem:[#allocation2 + $0x10] sm:$0x7]
        %v398 = vld [vmem:[#allocation2 + $0x14] sm:$0x7]
        %v399 = vld [vmem:[#allocation2 + $0x18] sm:$0x7]
        %v400 = vld [vmem:[#allocation2 + $0x1c] sm:$0x7]
        %v401 = vld [vmem:[#allocation2 + $0x20] sm:$0x7]
        %v402 = vld [vmem:[%s1] sm:$0xf]
        %v403 = vld [vmem:[%s1 + $0x4] sm:$0xf]
        %v404 = vld [vmem:[%s1 + $0x8] sm:$0xf]
        %v405 = vld [vmem:[%s1 + $0xc] sm:$0xf]
        %v406 = vld [vmem:[%s1 + $0x10] sm:$0xf]
        %v407 = vld [vmem:[%s1 + $0x14] sm:$0xf]
        %v408 = vld [vmem:[%s1 + $0x18] sm:$0xf]
        %v409 = vld [vmem:[%s1 + $0x1c] sm:$0xf]
        %v410 = vld [vmem:[%s1 + $0x20] sm:$0xf]
        %v411 = vld [vmem:[%s1 + $0x24] sm:$0xf]
        %v412 = vld [vmem:[%s1 + $0x28] sm:$0xf]
        %v413 = vld [vmem:[%s1 + $0x2c] sm:$0xf]
        %v414 = vld [vmem:[%s1 + $0x30] sm:$0xf]
        %v415 = vld [vmem:[%s1 + $0x34] sm:$0xf]
        %v416 = vld [vmem:[%s1 + $0x38] sm:$0xf]
        %v417 = vld [vmem:[%s1 + $0x3c] sm:$0xf]
        %v418 = vld [vmem:[%s1 + $0x40] sm:$0xf]
        %v419 = vld [vmem:[%s1 + $0x44] sm:$0xf]
        %v425 = vunpack.c.l.s4 1983009808
        %v426 = vunpack.c.0.s8 %v425
        %v427 = vlaneseq
        %v428 = vshrl.u32 %v427, 7
        %v429 = vsub.s32 %v426, %v428
        %v430 = vrot.slane %v393, %v429
        %v431 = vcombine.high %v430, %v430
        %v433 = vunpack.c.l.s4 1983009808
        %v434 = vunpack.c.0.s8 %v433
        %v435 = vlaneseq
        %v436 = vshrl.u32 %v435, 7
        %v437 = vsub.s32 %v434, %v436
        %v438 = vrot.slane %v395, %v437
        %v439 = vcombine.high %v438, %v438
        %v441 = vunpack.c.l.s4 1983009808
        %v442 = vunpack.c.0.s8 %v441
        %v443 = vlaneseq
        %v444 = vshrl.u32 %v443, 7
        %v445 = vsub.s32 %v442, %v444
        %v446 = vrot.slane %v397, %v445
        %v447 = vcombine.high %v446, %v446
        %v449 = vunpack.c.l.s4 1983009808
        %v450 = vunpack.c.0.s8 %v449
        %v451 = vlaneseq
        %v452 = vshrl.u32 %v451, 7
        %v453 = vsub.s32 %v450, %v452
        %v454 = vrot.slane %v399, %v453
        %v455 = vcombine.high %v454, %v454
        %vm456 = vsmask.f32 1280
        %vm457 = vsmask.f32 3336
        %vm458 = vmor %vm456, %vm457
        %vm459 = vsmask.f32 5392
        %vm460 = vmor %vm458, %vm459
        %vm461 = vsmask.f32 7448
        %vm462 = vmor %vm460, %vm461
        %v464 = vshrl.u32 %v430, 16
        %v466 = vrot.slane %v464, 6
        %v467 = vshll.u32 %v430, 16
        %v469 = vrot.slane %v467, 7
        %v470 = vor.u32 %v466, %v469
        %v471 = vrot.slane %v470, 2
        %v473 = vshll.u32 %v431, 16
        %v475 = vrot.slane %v473, 7
        %v476 = vsel %vm462, %v471, %v475
        %v478 = vshrl.u32 %v438, 16
        %v480 = vrot.slane %v478, 6
        %v481 = vshll.u32 %v438, 16
        %v483 = vrot.slane %v481, 7
        %v484 = vor.u32 %v480, %v483
        %v485 = vrot.slane %v484, 2
        %v487 = vshll.u32 %v439, 16
        %v489 = vrot.slane %v487, 7
        %v490 = vsel %vm462, %v485, %v489
        %v492 = vshrl.u32 %v446, 16
        %v494 = vrot.slane %v492, 6
        %v495 = vshll.u32 %v446, 16
        %v497 = vrot.slane %v495, 7
        %v498 = vor.u32 %v494, %v497
        %v499 = vrot.slane %v498, 2
        %v501 = vshll.u32 %v447, 16
        %v503 = vrot.slane %v501, 7
        %v504 = vsel %vm462, %v499, %v503
        %v506 = vshrl.u32 %v454, 16
        %v508 = vrot.slane %v506, 6
        %v509 = vshll.u32 %v454, 16
        %v511 = vrot.slane %v509, 7
        %v512 = vor.u32 %v508, %v511
        %v513 = vrot.slane %v512, 2
        %v515 = vshll.u32 %v455, 16
        %v517 = vrot.slane %v515, 7
        %v518 = vsel %vm462, %v513, %v517
        %v519 = vcombine.low %v476, %v490
        %v520 = vcombine.low %v504, %v518
        %v522 = vunpack.c.l.s4 1983009808
        %v523 = vunpack.c.0.s8 %v522
        %v524 = vlaneseq
        %v525 = vshrl.u32 %v524, 7
        %v526 = vsub.s32 %v523, %v525
        %v527 = vrot.slane %v519, %v526
        %v529 = vunpack.c.l.s4 1983009808
        %v530 = vunpack.c.0.s8 %v529
        %v531 = vlaneseq
        %v532 = vshrl.u32 %v531, 7
        %v533 = vsub.s32 %v530, %v532
        %v534 = vrot.slane %v520, %v533
        %v535 = vcombine.low %v527, %v534
        %v539 = vunpack.c.l.b16 %v405
        %v540 = vunpack.c.l.b16 %v406
        %v541 = vunpack.c.l.b16 %v407
        %v542 = vpack.c.b16 %v540, %v539
        %v543 = vpack.c.b16 %v541, %v541
        %vm545 = vcmask 195584
        %v547 = vsel %vm545, %v535, 0
        %vm549 = vcmask 1043456
        %v551 = vsel %vm549, %v543, 0
        %553 = vmatprep.subr.bf16.mxu0 0
        %554 = vmatpush1.bf16.msra.mxu0 %v542
        %555 = vmatprep.subr.bf16.mxu0 0
        %556 = vmatpush1.bf16.msra.mxu0 %v551
        %557 = vmatprep.subr.bf16.mxu0 0
        %558 = vmatpush1.bf16.msra.mxu0 0
        %559 = vmatprep.subr.bf16.mxu0 0
        %560 = vmatpush1.bf16.msra.mxu0 0
        %561 = vmatprep.subr.bf16.mxu0 0
        %562 = vmatpush1.bf16.msra.mxu0 0
        %563 = vmatprep.subr.bf16.mxu0 0
        %564 = vmatpush1.bf16.msra.mxu0 0
        %565 = vmatprep.subr.bf16.mxu0 0
        %566 = vmatpush1.bf16.msra.mxu0 0
        %567 = vmatprep.subr.bf16.mxu0 0
        %568 = vmatpush1.bf16.msra.mxu0 0
        %569 = vmatprep.subr.bf16.mxu0 0
        %570 = vmatpush1.bf16.msra.mxu0 0
        %571 = vmatprep.subr.bf16.mxu0 0
        %572 = vmatpush1.bf16.msra.mxu0 0
        %573 = vmatprep.subr.bf16.mxu0 0
        %574 = vmatpush1.bf16.msra.mxu0 0
        %575 = vmatprep.subr.bf16.mxu0 0
        %576 = vmatpush1.bf16.msra.mxu0 0
        %577 = vmatprep.subr.bf16.mxu0 0
        %578 = vmatpush1.bf16.msra.mxu0 0
        %579 = vmatprep.subr.bf16.mxu0 0
        %580 = vmatpush1.bf16.msra.mxu0 0
        %581 = vmatprep.subr.bf16.mxu0 0
        %582 = vmatpush1.bf16.msra.mxu0 0
        %583 = vmatprep.subr.bf16.mxu0 0
        %584 = vmatpush1.bf16.msra.mxu0 0
        %585 = vmatprep.mubr.bf16.mxu0 0
        %586 = vmatmul.mubr.bf16.gmra.mrb[0].mxu0 %v547
        %v587 = vpop.f32.mrb[0].mxu0
        %v588 = vadd.f32 0.0, %v587
        %v589 = vpop.f32.mrb[0].mxu0
        %v590 = vpop.f32.mrb[0].mxu0
        %v591 = vadd.f32 0.0, %v590
        %v592 = vpop.f32.mrb[0].mxu0
        %593 = vdwg.mxu0
        %v594 = vcombine.low %v393, %v395
        %v595 = vcombine.low %v397, %v399
        %v597 = vunpack.c.l.s4 1983009808
        %v598 = vunpack.c.0.s8 %v597
        %v599 = vlaneseq
        %v600 = vshrl.u32 %v599, 7
        %v601 = vsub.s32 %v598, %v600
        %v602 = vrot.slane %v594, %v601
        %v604 = vunpack.c.l.s4 1983009808
        %v605 = vunpack.c.0.s8 %v604
        %v606 = vlaneseq
        %v607 = vshrl.u32 %v606, 7
        %v608 = vsub.s32 %v605, %v607
        %v609 = vrot.slane %v595, %v608
        %v610 = vcombine.low %v602, %v609
        %v614 = vunpack.c.l.b16 %v402
        %v615 = vunpack.c.l.b16 %v403
        %v616 = vunpack.c.l.b16 %v404
        %v617 = vpack.c.b16 %v615, %v614
        %v618 = vpack.c.b16 %v616, %v616
        %v621 = vsel %vm545, %v610, 0
        %v624 = vsel %vm549, %v618, 0
        %626 = vmatprep.subr.bf16.mxu0 0
        %627 = vmatpush1.bf16.msra.mxu0 %v617
        %628 = vmatprep.subr.bf16.mxu0 0
        %629 = vmatpush1.bf16.msra.mxu0 %v624
        %630 = vmatprep.subr.bf16.mxu0 0
        %631 = vmatpush1.bf16.msra.mxu0 0
        %632 = vmatprep.subr.bf16.mxu0 0
        %633 = vmatpush1.bf16.msra.mxu0 0
        %634 = vmatprep.subr.bf16.mxu0 0
        %635 = vmatpush1.bf16.msra.mxu0 0
        %636 = vmatprep.subr.bf16.mxu0 0
        %637 = vmatpush1.bf16.msra.mxu0 0
        %638 = vmatprep.subr.bf16.mxu0 0
        %639 = vmatpush1.bf16.msra.mxu0 0
        %640 = vmatprep.subr.bf16.mxu0 0
        %641 = vmatpush1.bf16.msra.mxu0 0
        %642 = vmatprep.subr.bf16.mxu0 0
        %643 = vmatpush1.bf16.msra.mxu0 0
        %644 = vmatprep.subr.bf16.mxu0 0
        %645 = vmatpush1.bf16.msra.mxu0 0
        %646 = vmatprep.subr.bf16.mxu0 0
        %647 = vmatpush1.bf16.msra.mxu0 0
        %648 = vmatprep.subr.bf16.mxu0 0
        %649 = vmatpush1.bf16.msra.mxu0 0
        %650 = vmatprep.subr.bf16.mxu0 0
        %651 = vmatpush1.bf16.msra.mxu0 0
        %652 = vmatprep.subr.bf16.mxu0 0
        %653 = vmatpush1.bf16.msra.mxu0 0
        %654 = vmatprep.subr.bf16.mxu0 0
        %655 = vmatpush1.bf16.msra.mxu0 0
        %656 = vmatprep.subr.bf16.mxu0 0
        %657 = vmatpush1.bf16.msra.mxu0 0
        %658 = vmatprep.mubr.bf16.mxu0 0
        %659 = vmatmul.mubr.bf16.gmra.mrb[0].mxu0 %v621
        %v660 = vpop.f32.mrb[0].mxu0
        %v661 = vadd.f32 %v588, %v660
        %v662 = vpop.f32.mrb[0].mxu0
        %v663 = vpop.f32.mrb[0].mxu0
        %v664 = vadd.f32 %v591, %v663
        %v665 = vpop.f32.mrb[0].mxu0
        %666 = vdwg.mxu0
        %v671 = vcombine.low %v394, %v396
        %v672 = vcombine.low %v398, %v400
        %v674 = vunpack.c.l.s4 1983009808
        %v675 = vunpack.c.0.s8 %v674
        %v676 = vlaneseq
        %v677 = vshrl.u32 %v676, 7
        %v678 = vsub.s32 %v675, %v677
        %v679 = vrot.slane %v671, %v678
        %v681 = vunpack.c.l.s4 1983009808
        %v682 = vunpack.c.0.s8 %v681
        %v683 = vlaneseq
        %v684 = vshrl.u32 %v683, 7
        %v685 = vsub.s32 %v682, %v684
        %v686 = vrot.slane %v672, %v685
        %v687 = vcombine.low %v679, %v686
        %v691 = vunpack.c.l.b16 %v408
        %v692 = vunpack.c.l.b16 %v409
        %v693 = vunpack.c.l.b16 %v410
        %v694 = vpack.c.b16 %v692, %v691
        %v695 = vpack.c.b16 %v693, %v693
        %v698 = vsel %vm545, %v687, 0
        %v701 = vsel %vm549, %v695, 0
        %703 = vmatprep.subr.bf16.mxu0 0
        %704 = vmatpush1.bf16.msra.mxu0 %v694
        %705 = vmatprep.subr.bf16.mxu0 0
        %706 = vmatpush1.bf16.msra.mxu0 %v701
        %707 = vmatprep.subr.bf16.mxu0 0
        %708 = vmatpush1.bf16.msra.mxu0 0
        %709 = vmatprep.subr.bf16.mxu0 0
        %710 = vmatpush1.bf16.msra.mxu0 0
        %711 = vmatprep.subr.bf16.mxu0 0
        %712 = vmatpush1.bf16.msra.mxu0 0
        %713 = vmatprep.subr.bf16.mxu0 0
        %714 = vmatpush1.bf16.msra.mxu0 0
        %715 = vmatprep.subr.bf16.mxu0 0
        %716 = vmatpush1.bf16.msra.mxu0 0
        %717 = vmatprep.subr.bf16.mxu0 0
        %718 = vmatpush1.bf16.msra.mxu0 0
        %719 = vmatprep.subr.bf16.mxu0 0
        %720 = vmatpush1.bf16.msra.mxu0 0
        %721 = vmatprep.subr.bf16.mxu0 0
        %722 = vmatpush1.bf16.msra.mxu0 0
        %723 = vmatprep.subr.bf16.mxu0 0
        %724 = vmatpush1.bf16.msra.mxu0 0
        %725 = vmatprep.subr.bf16.mxu0 0
        %726 = vmatpush1.bf16.msra.mxu0 0
        %727 = vmatprep.subr.bf16.mxu0 0
        %728 = vmatpush1.bf16.msra.mxu0 0
        %729 = vmatprep.subr.bf16.mxu0 0
        %730 = vmatpush1.bf16.msra.mxu0 0
        %731 = vmatprep.subr.bf16.mxu0 0
        %732 = vmatpush1.bf16.msra.mxu0 0
        %733 = vmatprep.subr.bf16.mxu0 0
        %734 = vmatpush1.bf16.msra.mxu0 0
        %735 = vmatprep.mubr.bf16.mxu0 0
        %736 = vmatmul.mubr.bf16.gmra.mrb[0].mxu0 %v698
        %v737 = vpop.f32.mrb[0].mxu0
        %v738 = vadd.f32 0.0, %v737
        %v739 = vpop.f32.mrb[0].mxu0
        %v740 = vpop.f32.mrb[0].mxu0
        %v741 = vadd.f32 0.0, %v740
        %v742 = vpop.f32.mrb[0].mxu0
        %743 = vdwg.mxu0
        %v744 = vadd.f32 %v661, %v738
        %v745 = vadd.f32 %v664, %v741
        %v747 = vunpack.c.l.s4 1983009808
        %v748 = vunpack.c.0.s8 %v747
        %v749 = vlaneseq
        %v750 = vshrl.u32 %v749, 7
        %v751 = vsub.s32 %v748, %v750
        %v752 = vrot.slane %v394, %v751
        %v753 = vcombine.high %v752, %v752
        %v755 = vunpack.c.l.s4 1983009808
        %v756 = vunpack.c.0.s8 %v755
        %v757 = vlaneseq
        %v758 = vshrl.u32 %v757, 7
        %v759 = vsub.s32 %v756, %v758
        %v760 = vrot.slane %v396, %v759
        %v761 = vcombine.high %v760, %v760
        %v763 = vunpack.c.l.s4 1983009808
        %v764 = vunpack.c.0.s8 %v763
        %v765 = vlaneseq
        %v766 = vshrl.u32 %v765, 7
        %v767 = vsub.s32 %v764, %v766
        %v768 = vrot.slane %v398, %v767
        %v769 = vcombine.high %v768, %v768
        %v771 = vunpack.c.l.s4 1983009808
        %v772 = vunpack.c.0.s8 %v771
        %v773 = vlaneseq
        %v774 = vshrl.u32 %v773, 7
        %v775 = vsub.s32 %v772, %v774
        %v776 = vrot.slane %v400, %v775
        %v777 = vcombine.high %v776, %v776
        %v779 = vshrl.u32 %v752, 16
        %v781 = vrot.slane %v779, 6
        %v782 = vshll.u32 %v752, 16
        %v784 = vrot.slane %v782, 7
        %v785 = vor.u32 %v781, %v784
        %v786 = vrot.slane %v785, 2
        %v788 = vshll.u32 %v753, 16
        %v790 = vrot.slane %v788, 7
        %v791 = vsel %vm462, %v786, %v790
        %v793 = vshrl.u32 %v760, 16
        %v795 = vrot.slane %v793, 6
        %v796 = vshll.u32 %v760, 16
        %v798 = vrot.slane %v796, 7
        %v799 = vor.u32 %v795, %v798
        %v800 = vrot.slane %v799, 2
        %v802 = vshll.u32 %v761, 16
        %v804 = vrot.slane %v802, 7
        %v805 = vsel %vm462, %v800, %v804
        %v807 = vshrl.u32 %v768, 16
        %v809 = vrot.slane %v807, 6
        %v810 = vshll.u32 %v768, 16
        %v812 = vrot.slane %v810, 7
        %v813 = vor.u32 %v809, %v812
        %v814 = vrot.slane %v813, 2
        %v816 = vshll.u32 %v769, 16
        %v818 = vrot.slane %v816, 7
        %v819 = vsel %vm462, %v814, %v818
        %v821 = vshrl.u32 %v776, 16
        %v823 = vrot.slane %v821, 6
        %v824 = vshll.u32 %v776, 16
        %v826 = vrot.slane %v824, 7
        %v827 = vor.u32 %v823, %v826
        %v828 = vrot.slane %v827, 2
        %v830 = vshll.u32 %v777, 16
        %v832 = vrot.slane %v830, 7
        %v833 = vsel %vm462, %v828, %v832
        %v834 = vcombine.low %v791, %v805
        %v835 = vcombine.low %v819, %v833
        %v837 = vunpack.c.l.s4 1983009808
        %v838 = vunpack.c.0.s8 %v837
        %v839 = vlaneseq
        %v840 = vshrl.u32 %v839, 7
        %v841 = vsub.s32 %v838, %v840
        %v842 = vrot.slane %v834, %v841
        %v844 = vunpack.c.l.s4 1983009808
        %v845 = vunpack.c.0.s8 %v844
        %v846 = vlaneseq
        %v847 = vshrl.u32 %v846, 7
        %v848 = vsub.s32 %v845, %v847
        %v849 = vrot.slane %v835, %v848
        %v850 = vcombine.low %v842, %v849
        %v854 = vunpack.c.l.b16 %v411
        %v855 = vunpack.c.l.b16 %v412
        %v856 = vunpack.c.l.b16 %v413
        %v857 = vpack.c.b16 %v855, %v854
        %v858 = vpack.c.b16 %v856, %v856
        %v861 = vsel %vm545, %v850, 0
        %v864 = vsel %vm549, %v858, 0
        %866 = vmatprep.subr.bf16.mxu0 0
        %867 = vmatpush1.bf16.msra.mxu0 %v857
        %868 = vmatprep.subr.bf16.mxu0 0
        %869 = vmatpush1.bf16.msra.mxu0 %v864
        %870 = vmatprep.subr.bf16.mxu0 0
        %871 = vmatpush1.bf16.msra.mxu0 0
        %872 = vmatprep.subr.bf16.mxu0 0
        %873 = vmatpush1.bf16.msra.mxu0 0
        %874 = vmatprep.subr.bf16.mxu0 0
        %875 = vmatpush1.bf16.msra.mxu0 0
        %876 = vmatprep.subr.bf16.mxu0 0
        %877 = vmatpush1.bf16.msra.mxu0 0
        %878 = vmatprep.subr.bf16.mxu0 0
        %879 = vmatpush1.bf16.msra.mxu0 0
        %880 = vmatprep.subr.bf16.mxu0 0
        %881 = vmatpush1.bf16.msra.mxu0 0
        %882 = vmatprep.subr.bf16.mxu0 0
        %883 = vmatpush1.bf16.msra.mxu0 0
        %884 = vmatprep.subr.bf16.mxu0 0
        %885 = vmatpush1.bf16.msra.mxu0 0
        %886 = vmatprep.subr.bf16.mxu0 0
        %887 = vmatpush1.bf16.msra.mxu0 0
        %888 = vmatprep.subr.bf16.mxu0 0
        %889 = vmatpush1.bf16.msra.mxu0 0
        %890 = vmatprep.subr.bf16.mxu0 0
        %891 = vmatpush1.bf16.msra.mxu0 0
        %892 = vmatprep.subr.bf16.mxu0 0
        %893 = vmatpush1.bf16.msra.mxu0 0
        %894 = vmatprep.subr.bf16.mxu0 0
        %895 = vmatpush1.bf16.msra.mxu0 0
        %896 = vmatprep.subr.bf16.mxu0 0
        %897 = vmatpush1.bf16.msra.mxu0 0
        %898 = vmatprep.mubr.bf16.mxu0 0
        %899 = vmatmul.mubr.bf16.gmra.mrb[0].mxu0 %v861
        %v900 = vpop.f32.mrb[0].mxu0
        %v901 = vadd.f32 0.0, %v900
        %v902 = vpop.f32.mrb[0].mxu0
        %v903 = vpop.f32.mrb[0].mxu0
        %v904 = vadd.f32 0.0, %v903
        %v905 = vpop.f32.mrb[0].mxu0
        %906 = vdwg.mxu0
        %v907 = vadd.f32 %v744, %v901
        %v908 = vadd.f32 %v745, %v904
        %v910 = vcombine.low %v395, %v397
        %v911 = vcombine.low %v399, %v401
        %v913 = vunpack.c.l.s4 1983009808
        %v914 = vunpack.c.0.s8 %v913
        %v915 = vlaneseq
        %v916 = vshrl.u32 %v915, 7
        %v917 = vsub.s32 %v914, %v916
        %v918 = vrot.slane %v910, %v917
        %v920 = vunpack.c.l.s4 1983009808
        %v921 = vunpack.c.0.s8 %v920
        %v922 = vlaneseq
        %v923 = vshrl.u32 %v922, 7
        %v924 = vsub.s32 %v921, %v923
        %v925 = vrot.slane %v911, %v924
        %v926 = vcombine.low %v918, %v925
        %v930 = vunpack.c.l.b16 %v414
        %v931 = vunpack.c.l.b16 %v415
        %v932 = vunpack.c.l.b16 %v416
        %v933 = vpack.c.b16 %v931, %v930
        %v934 = vpack.c.b16 %v932, %v932
        %v937 = vsel %vm545, %v926, 0
        %v940 = vsel %vm549, %v934, 0
        %942 = vmatprep.subr.bf16.mxu0 0
        %943 = vmatpush1.bf16.msra.mxu0 %v933
        %944 = vmatprep.subr.bf16.mxu0 0
        %945 = vmatpush1.bf16.msra.mxu0 %v940
        %946 = vmatprep.subr.bf16.mxu0 0
        %947 = vmatpush1.bf16.msra.mxu0 0
        %948 = vmatprep.subr.bf16.mxu0 0
        %949 = vmatpush1.bf16.msra.mxu0 0
        %950 = vmatprep.subr.bf16.mxu0 0
        %951 = vmatpush1.bf16.msra.mxu0 0
        %952 = vmatprep.subr.bf16.mxu0 0
        %953 = vmatpush1.bf16.msra.mxu0 0
        %954 = vmatprep.subr.bf16.mxu0 0
        %955 = vmatpush1.bf16.msra.mxu0 0
        %956 = vmatprep.subr.bf16.mxu0 0
        %957 = vmatpush1.bf16.msra.mxu0 0
        %958 = vmatprep.subr.bf16.mxu0 0
        %959 = vmatpush1.bf16.msra.mxu0 0
        %960 = vmatprep.subr.bf16.mxu0 0
        %961 = vmatpush1.bf16.msra.mxu0 0
        %962 = vmatprep.subr.bf16.mxu0 0
        %963 = vmatpush1.bf16.msra.mxu0 0
        %964 = vmatprep.subr.bf16.mxu0 0
        %965 = vmatpush1.bf16.msra.mxu0 0
        %966 = vmatprep.subr.bf16.mxu0 0
        %967 = vmatpush1.bf16.msra.mxu0 0
        %968 = vmatprep.subr.bf16.mxu0 0
        %969 = vmatpush1.bf16.msra.mxu0 0
        %970 = vmatprep.subr.bf16.mxu0 0
        %971 = vmatpush1.bf16.msra.mxu0 0
        %972 = vmatprep.subr.bf16.mxu0 0
        %973 = vmatpush1.bf16.msra.mxu0 0
        %974 = vmatprep.mubr.bf16.mxu0 0
        %975 = vmatmul.mubr.bf16.gmra.mrb[0].mxu0 %v937
        %v976 = vpop.f32.mrb[0].mxu0
        %v977 = vadd.f32 0.0, %v976
        %v978 = vpop.f32.mrb[0].mxu0
        %v979 = vpop.f32.mrb[0].mxu0
        %v980 = vadd.f32 0.0, %v979
        %v981 = vpop.f32.mrb[0].mxu0
        %982 = vdwg.mxu0
        %v983 = vadd.f32 %v907, %v977
        %v984 = vadd.f32 %v908, %v980
        %v986 = vunpack.c.l.s4 1983009808
        %v987 = vunpack.c.0.s8 %v986
        %v988 = vlaneseq
        %v989 = vshrl.u32 %v988, 7
        %v990 = vsub.s32 %v987, %v989
        %v991 = vrot.slane %v401, %v990
        %v992 = vcombine.high %v991, %v991
        %v994 = vshrl.u32 %v991, 16
        %v996 = vrot.slane %v994, 6
        %v997 = vshll.u32 %v991, 16
        %v999 = vrot.slane %v997, 7
        %v1000 = vor.u32 %v996, %v999
        %v1001 = vrot.slane %v1000, 2
        %v1003 = vshll.u32 %v992, 16
        %v1005 = vrot.slane %v1003, 7
        %v1006 = vsel %vm462, %v1001, %v1005
        %v1007 = vcombine.low %v490, %v504
        %v1008 = vcombine.low %v518, %v1006
        %v1010 = vunpack.c.l.s4 1983009808
        %v1011 = vunpack.c.0.s8 %v1010
        %v1012 = vlaneseq
        %v1013 = vshrl.u32 %v1012, 7
        %v1014 = vsub.s32 %v1011, %v1013
        %v1015 = vrot.slane %v1007, %v1014
        %v1017 = vunpack.c.l.s4 1983009808
        %v1018 = vunpack.c.0.s8 %v1017
        %v1019 = vlaneseq
        %v1020 = vshrl.u32 %v1019, 7
        %v1021 = vsub.s32 %v1018, %v1020
        %v1022 = vrot.slane %v1008, %v1021
        %v1023 = vcombine.low %v1015, %v1022
        %v1027 = vunpack.c.l.b16 %v417
        %v1028 = vunpack.c.l.b16 %v418
        %v1029 = vunpack.c.l.b16 %v419
        %v1030 = vpack.c.b16 %v1028, %v1027
        %v1031 = vpack.c.b16 %v1029, %v1029
        %v1034 = vsel %vm545, %v1023, 0
        %v1037 = vsel %vm549, %v1031, 0
        %1039 = vmatprep.subr.bf16.mxu0 0
        %1040 = vmatpush1.bf16.msra.mxu0 %v1030
        %1041 = vmatprep.subr.bf16.mxu0 0
        %1042 = vmatpush1.bf16.msra.mxu0 %v1037
        %1043 = vmatprep.subr.bf16.mxu0 0
        %1044 = vmatpush1.bf16.msra.mxu0 0
        %1045 = vmatprep.subr.bf16.mxu0 0
        %1046 = vmatpush1.bf16.msra.mxu0 0
        %1047 = vmatprep.subr.bf16.mxu0 0
        %1048 = vmatpush1.bf16.msra.mxu0 0
        %1049 = vmatprep.subr.bf16.mxu0 0
        %1050 = vmatpush1.bf16.msra.mxu0 0
        %1051 = vmatprep.subr.bf16.mxu0 0
        %1052 = vmatpush1.bf16.msra.mxu0 0
        %1053 = vmatprep.subr.bf16.mxu0 0
        %1054 = vmatpush1.bf16.msra.mxu0 0
        %1055 = vmatprep.subr.bf16.mxu0 0
        %1056 = vmatpush1.bf16.msra.mxu0 0
        %1057 = vmatprep.subr.bf16.mxu0 0
        %1058 = vmatpush1.bf16.msra.mxu0 0
        %1059 = vmatprep.subr.bf16.mxu0 0
        %1060 = vmatpush1.bf16.msra.mxu0 0
        %1061 = vmatprep.subr.bf16.mxu0 0
        %1062 = vmatpush1.bf16.msra.mxu0 0
        %1063 = vmatprep.subr.bf16.mxu0 0
        %1064 = vmatpush1.bf16.msra.mxu0 0
        %1065 = vmatprep.subr.bf16.mxu0 0
        %1066 = vmatpush1.bf16.msra.mxu0 0
        %1067 = vmatprep.subr.bf16.mxu0 0
        %1068 = vmatpush1.bf16.msra.mxu0 0
        %1069 = vmatprep.subr.bf16.mxu0 0
        %1070 = vmatpush1.bf16.msra.mxu0 0
        %1071 = vmatprep.mubr.bf16.mxu0 0
        %1072 = vmatmul.mubr.bf16.gmra.mrb[0].mxu0 %v1034
        %v1073 = vpop.f32.mrb[0].mxu0
        %v1074 = vadd.f32 0.0, %v1073
        %v1075 = vpop.f32.mrb[0].mxu0
        %v1076 = vpop.f32.mrb[0].mxu0
        %v1077 = vadd.f32 0.0, %v1076
        %v1078 = vpop.f32.mrb[0].mxu0
        %1079 = vdwg.mxu0
        %v1080 = vadd.f32 %v983, %v1074
        %v1081 = vadd.f32 %v984, %v1077
        %v1082 = vld [vmem:[%s2] sm:$0x1]
        %v1084 = vlaneseq
        %v1085 = vshrl.u32 %v1084, 7
        %v1086 = vsub.s32 0, %v1085
        %v1087 = vrot.slane %v1082, %v1086
        %v1089 = vadd.f32 %v1080, %v1087
        %v1090 = vadd.f32 %v1081, %v1087
        %v1091 = vld [vmem:[%s3] sm:$0x1]
        %vm1092 = vcmp.ge.f32.partialorder %v1089, 0.0
        %vm1093 = vcmp.ge.f32.partialorder %v1090, 0.0
        %v1095 = vlaneseq
        %v1096 = vshrl.u32 %v1095, 7
        %v1097 = vsub.s32 0, %v1096
        %v1098 = vrot.slane %v1091, %v1097
        %v1100 = vmul.f32 %v1089, %v1098
        %v1101 = vmul.f32 %v1090, %v1098
        %v1102 = vsel %vm1092, %v1089, %v1100
        %v1103 = vsel %vm1093, %v1090, %v1101
        %v1104 = vpack.c.bf16 %v1103, %v1102
        %v1106 = vunpack.c.l.b16 %v1104
        %v1107 = vunpack.c.h.b16 %v1104
        %v1108 = vpack.c.b16 %v1106, %v1106
        %v1109 = vpack.c.b16 %v1107, %v1107
        %vm1112 = vcmask 125952
        %1113 = vst.msk [vmem:[%s190] sm:$0xf] %vm1112, %v1108
        %1114 = vst.msk [vmem:[%s190 + $0x4] sm:$0xf] %vm1112, %v1109
        %s1115 = sand.u32 %s115, 1
        %s1116 = scalar_lea.sflag [#allocation4], %s1115
        %s1117 = sand.u32 %s115, 1
        %s1118 = smul.addr %s1117, 8
        %s1119 = scalar_lea.vmem [#allocation3], %s1118
        // Predicated region
        $region37: #{tpu_custom_call.1} parent=35 // pred_check
          %p1120 = pneg %p125
        $region38: #{tpu_custom_call.1} parent=35 // pred_check_branch
          %1122 = sbr.rel (%p1120) target = $region40
        $region39: #{tpu_custom_call.1} parent=35 // pred_region
          %s1124 = ssub.s32 128, 128
          %1125 = vsyncadd %s1116, %s1124
          %s1126 = smul.addr %s18, 2
          %s1127 = smul.addr %s1126, 64
          %s1128 = scalar_lea.hbm %s4, %s1127
          %s1129 = sshll.u32 %s1119, 4
          %s1130 = int_to_ptr.vmem [resolvable:$true] %s1129
          %1135 = dma.vmem_to_hbm [thread:$0]  %s1130, 128, %s1128, %s1116, 64, 64, 4
        $region40: #{tpu_custom_call.1} parent=35 // pred_fallthru
          _
      $region36: #{tpu_custom_call.1} parent=5 // pred_fallthru
        _
      %p1136 = scmp.le.s32.totalorder 2, %s13
      // Predicated region
      $region41: #{tpu_custom_call.1} parent=5 // pred_check
        %p1137 = pneg %p1136
      $region42: #{tpu_custom_call.1} parent=5 // pred_check_branch
        %1139 = sbr.rel (%p1137) target = $region44
      $region43: #{tpu_custom_call.1} parent=5 // pred_region
        %s1140 = ssub.s32 %s13, 2
        // Predicated region
        $region45: #{tpu_custom_call.1} parent=43 // pred_check
          %p1141 = pneg %p131
        $region46: #{tpu_custom_call.1} parent=43 // pred_check_branch
          %1143 = sbr.rel (%p1141) target = $region48
        $region47: #{tpu_custom_call.1} parent=43 // pred_region
          %s1144 = sand.u32 %s116, 1
          %s1145 = scalar_lea.sflag [#allocation4], %s1144
          %s1146 = sand.u32 %s116, 1
          %s1147 = smul.addr %s1146, 8
          %s1148 = scalar_lea.vmem [#allocation3], %s1147
          %1149 = dma.done %s1145, 128
        $region48: #{tpu_custom_call.1} parent=43 // pred_fallthru
          _
      $region44: #{tpu_custom_call.1} parent=5 // pred_fallthru
        _
    $region6: #{tpu_custom_call.1} parent=1 // loop_footer
      %s17 = sadd.s32 1, %s13
    $region7: #{tpu_custom_call.1} parent=1 // loop_footer_branch
      %12 = sbr.rel target = $region3
    $region8: #{tpu_custom_call.1} parent=1 // loop_exit
      _
    %1150 = vsyncpa [#allocation4], 1
    %s1151 = scalar_lea.sflag [#allocation4], 1
    %1152 = vsyncpa %s1151, 1

</llo_original>
